<compile_context>
chip_gen: v6e
topology: v6e:2x2x1
jax: 0.10.0
libtpu: 0.0.40
codegen_flags: <defaults>
</compile_context>

<pallas_src>
import functools

import jax
import jax.numpy as jnp
from jax.experimental import pallas as pl
from jax.experimental.pallas import tpu as pltpu


def _round_up(a, b):
    return (a + b - 1) // b * b


def _adapter_kernel(x_ref, res_ref, lnw_ref, lnb_ref, wd_ref, bd_ref,
                    wu_ref, bu_ref, out_ref, down_ref, up_ref, *, eps):
    """One row-tile of the Adapter forward.

    x_ref:   [TM, C]   input rows
    res_ref: [TM, C]   residual rows
    lnw_ref: [1, C]    LayerNorm weight
    lnb_ref: [1, C]    LayerNorm bias
    wd_ref:  [C, D]    down-projection weight (already [in, out] layout)
    bd_ref:  [1, D]    down-projection bias
    wu_ref:  [D, C]    up-projection weight
    bu_ref:  [1, C]    up-projection bias
    out_ref: [TM, C]   output = up + residual
    down_ref:[TM, D]   post-activation down projection
    up_ref:  [TM, C]   up projection (pre-residual)
    """
    x = x_ref[...].astype(jnp.float32)                      # [TM, C]

    # LayerNorm (biased variance over the channel axis, like nn.LayerNorm).
    mean = jnp.mean(x, axis=-1, keepdims=True)
    xc = x - mean
    var = jnp.mean(xc * xc, axis=-1, keepdims=True)
    h = xc * jax.lax.rsqrt(var + jnp.float32(eps))           # EUP rsqrt
    h = h * lnw_ref[...].astype(jnp.float32) + lnb_ref[...].astype(jnp.float32)

    # Down projection + ReLU  (MXU matmul, f32 accumulate).
    down = jnp.dot(h, wd_ref[...], preferred_element_type=jnp.float32)
    down = jnp.maximum(down + bd_ref[...].astype(jnp.float32), 0.0)   # [TM, D]

    # Up projection.
    up = jnp.dot(down, wu_ref[...], preferred_element_type=jnp.float32)
    up = up + bu_ref[...].astype(jnp.float32)                 # [TM, C]

    # Residual add (residual_before_ln=True, add_layer_norm_after=False).
    out = up + res_ref[...].astype(jnp.float32)

    out_ref[...] = out.astype(out_ref.dtype)
    down_ref[...] = down.astype(down_ref.dtype)
    up_ref[...] = up.astype(up_ref.dtype)


def adapter_forward(x, residual, ln_w, ln_b, wd, bd, wu, bu,
                    *, eps=1e-5, row_tile=256):
    """x, residual: [B, S, C] -> (output [B,S,C], down [B,S,D], up [B,S,C]).

    Weights are expected in [in, out] layout (i.e. transposed nn.Linear.weight).
    """
    B, S, C = x.shape
    D = wd.shape[1]
    assert wd.shape == (C, D) and wu.shape == (D, C)
    assert ln_w.shape == (1, C) and ln_b.shape == (1, C)
    assert bd.shape == (1, D) and bu.shape == (1, C)

    N = B * S
    # Effective row tile: as large as requested, but never (much) larger than N,
    # and always a multiple of 8 (sublane alignment).
    rt = max(8, min(int(row_tile), _round_up(N, 8)))
    rt = _round_up(rt, 8)
    Np = _round_up(N, rt)
    num_tiles = pl.cdiv(Np, rt)

    xf = x.reshape(N, C)
    rf = residual.reshape(N, C)
    if Np != N:
        pad = ((0, Np - N), (0, 0))
        xf = jnp.pad(xf, pad)
        rf = jnp.pad(rf, pad)

    kernel = functools.partial(_adapter_kernel, eps=float(eps))

    row_spec_c = pl.BlockSpec((rt, C), lambda i: (i, 0))
    row_spec_d = pl.BlockSpec((rt, D), lambda i: (i, 0))
    # Constant index_map -> the block index never changes, so the weight/bias
    # DMAs are issued only on the first grid step.
    const = lambda shape: pl.BlockSpec(shape, lambda i: (0, 0))

    out_f, down_f, up_f = pl.pallas_call(
        kernel,
        out_shape=(
            jax.ShapeDtypeStruct((Np, C), x.dtype),
            jax.ShapeDtypeStruct((Np, D), x.dtype),
            jax.ShapeDtypeStruct((Np, C), x.dtype),
        ),
        grid=(num_tiles,),
        in_specs=[
            row_spec_c,            # x
            row_spec_c,            # residual
            const((1, C)),         # ln_w
            const((1, C)),         # ln_b
            const((C, D)),         # wd
            const((1, D)),         # bd
            const((D, C)),         # wu
            const((1, C)),         # bu
        ],
        out_specs=(row_spec_c, row_spec_d, row_spec_c),
        compiler_params=pltpu.CompilerParams(
            dimension_semantics=("parallel",)),
    )(xf, rf, ln_w, ln_b, wd, bd, wu, bu)

    out = out_f[:N].reshape(B, S, C)
    down = down_f[:N].reshape(B, S, D)
    up = up_f[:N].reshape(B, S, C)
    return out, down, up


def _reference(x, residual, ln_w, ln_b, wd, bd, wu, bu, eps=1e-5):
    """Pure-JAX reference of the Adapter forward (default config)."""
    mean = x.mean(axis=-1, keepdims=True)
    var = ((x - mean) ** 2).mean(axis=-1, keepdims=True)
    h = (x - mean) / jnp.sqrt(var + eps) * ln_w[0] + ln_b[0]
    down = jax.nn.relu(
        jnp.dot(h, wd, precision=jax.lax.Precision.HIGHEST) + bd[0])
    up = jnp.dot(down, wu, precision=jax.lax.Precision.HIGHEST) + bu[0]
    out = up + residual
    return out, down, up


if __name__ == "__main__":
    # Small-but-lane-aligned demo config: input_size=256, down_sample=128 (= C//2).
    # N = B*S = 144 is deliberately NOT a multiple of the row tile to exercise
    # the cdiv + padding path; row_tile=64 gives a 3-step parallel grid.
    B, S, C = 2, 72, 256
    D = C // 2
    eps = 1e-5

    key = jax.random.PRNGKey(0)
    kx, kr, k1, k2, k3, k4, k5, k6 = jax.random.split(key, 8)

    x = jax.random.normal(kx, (B, S, C), dtype=jnp.float32)
    residual = jax.random.normal(kr, (B, S, C), dtype=jnp.float32)

    # LayerNorm params (init_bert_weights: weight=1, bias=0 — perturb slightly
    # so the affine path is actually exercised).
    ln_w = jnp.ones((1, C), jnp.float32) + 0.01 * jax.random.normal(k1, (1, C), jnp.float32)
    ln_b = 0.01 * jax.random.normal(k2, (1, C), jnp.float32)

    # Linear params in [in, out] layout, std=0.02 like init_bert_weights.
    wd = 0.02 * jax.random.normal(k3, (C, D), dtype=jnp.float32)
    bd = 0.01 * jax.random.normal(k4, (1, D), dtype=jnp.float32)
    wu = 0.02 * jax.random.normal(k5, (D, C), dtype=jnp.float32)
    bu = 0.01 * jax.random.normal(k6, (1, C), dtype=jnp.float32)

    out, down, up = adapter_forward(x, residual, ln_w, ln_b, wd, bd, wu, bu,
                                    eps=eps, row_tile=64)
    out = jax.block_until_ready(out)
    down = jax.block_until_ready(down)
    up = jax.block_until_ready(up)

    ref_out, ref_down, ref_up = _reference(x, residual, ln_w, ln_b, wd, bd, wu, bu, eps=eps)

    assert out.shape == (B, S, C) and down.shape == (B, S, D) and up.shape == (B, S, C)
    assert jnp.allclose(out, ref_out, atol=5e-3, rtol=5e-3), "output mismatch"
    assert jnp.allclose(down, ref_down, atol=5e-3, rtol=5e-3), "down mismatch"
    assert jnp.allclose(up, ref_up, atol=5e-3, rtol=5e-3), "up mismatch"

    print("KERNEL_OK")
</pallas_src>

<mosaic_0001>
module attributes {stable_mosaic.version = 11 : i64} {
  func.func @_adapter_kernel(%arg0: i32, %arg1: memref<64x256xf32, #tpu.memory_space<vmem>>, %arg2: memref<64x256xf32, #tpu.memory_space<vmem>>, %arg3: memref<1x256xf32, #tpu.memory_space<vmem>>, %arg4: memref<1x256xf32, #tpu.memory_space<vmem>>, %arg5: memref<256x128xf32, #tpu.memory_space<vmem>>, %arg6: memref<1x128xf32, #tpu.memory_space<vmem>>, %arg7: memref<128x256xf32, #tpu.memory_space<vmem>>, %arg8: memref<1x256xf32, #tpu.memory_space<vmem>>, %arg9: memref<64x256xf32, #tpu.memory_space<vmem>>, %arg10: memref<64x128xf32, #tpu.memory_space<vmem>>, %arg11: memref<64x256xf32, #tpu.memory_space<vmem>>) attributes {dimension_semantics = [#tpu.dimension_semantics<parallel>], iteration_bounds = array<i64: 3>, scalar_prefetch = 0 : i64, scratch_operands = 0 : i64, tpu.core_type = #tpu.core_type<tc>, window_params = [{transform_indices = @transform_0, window_bounds = array<i64: 64, 256>}, {transform_indices = @transform_1, window_bounds = array<i64: 64, 256>}, {pipeline_mode = #tpu.pipeline_mode<synchronous>, transform_indices = @transform_2, window_bounds = array<i64: 1, 256>}, {pipeline_mode = #tpu.pipeline_mode<synchronous>, transform_indices = @transform_3, window_bounds = array<i64: 1, 256>}, {pipeline_mode = #tpu.pipeline_mode<synchronous>, transform_indices = @transform_4, window_bounds = array<i64: 256, 128>}, {pipeline_mode = #tpu.pipeline_mode<synchronous>, transform_indices = @transform_5, window_bounds = array<i64: 1, 128>}, {pipeline_mode = #tpu.pipeline_mode<synchronous>, transform_indices = @transform_6, window_bounds = array<i64: 128, 256>}, {pipeline_mode = #tpu.pipeline_mode<synchronous>, transform_indices = @transform_7, window_bounds = array<i64: 1, 256>}, {transform_indices = @transform_8, window_bounds = array<i64: 64, 256>}, {transform_indices = @transform_9, window_bounds = array<i64: 64, 128>}, {transform_indices = @transform_10, window_bounds = array<i64: 64, 256>}]} {
    %c0 = arith.constant 0 : index
    %c0_0 = arith.constant 0 : index
    %0 = vector.load %arg1[%c0, %c0_0] : memref<64x256xf32, #tpu.memory_space<vmem>>, vector<64x256xf32>
    %cst = arith.constant dense<0.000000e+00> : vector<64xf32>
    %1 = vector.multi_reduction <add>, %0, %cst [1] : vector<64x256xf32> to vector<64xf32>
    %2 = vector.shape_cast %1 : vector<64xf32> to vector<64x1xf32>
    %cst_1 = arith.constant 2.560000e+02 : f32
    %3 = vector.broadcast %cst_1 : f32 to vector<64x1xf32>
    %4 = arith.divf %2, %3 : vector<64x1xf32>
    %5 = vector.broadcast %4 : vector<64x1xf32> to vector<64x256xf32>
    %6 = arith.subf %0, %5 : vector<64x256xf32>
    %7 = arith.mulf %6, %6 : vector<64x256xf32>
    %cst_2 = arith.constant dense<0.000000e+00> : vector<64xf32>
    %8 = vector.multi_reduction <add>, %7, %cst_2 [1] : vector<64x256xf32> to vector<64xf32>
    %9 = vector.shape_cast %8 : vector<64xf32> to vector<64x1xf32>
    %cst_3 = arith.constant 2.560000e+02 : f32
    %10 = vector.broadcast %cst_3 : f32 to vector<64x1xf32>
    %11 = arith.divf %9, %10 : vector<64x1xf32>
    %cst_4 = arith.constant 9.99999974E-6 : f32
    %12 = vector.broadcast %cst_4 : f32 to vector<64x1xf32>
    %13 = arith.addf %11, %12 : vector<64x1xf32>
    %14 = math.rsqrt %13 : vector<64x1xf32>
    %15 = vector.broadcast %14 : vector<64x1xf32> to vector<64x256xf32>
    %16 = arith.mulf %6, %15 : vector<64x256xf32>
    %c0_5 = arith.constant 0 : index
    %c0_6 = arith.constant 0 : index
    %17 = vector.load %arg3[%c0_5, %c0_6] : memref<1x256xf32, #tpu.memory_space<vmem>>, vector<1x256xf32>
    %18 = vector.broadcast %17 : vector<1x256xf32> to vector<64x256xf32>
    %19 = arith.mulf %16, %18 : vector<64x256xf32>
    %c0_7 = arith.constant 0 : index
    %c0_8 = arith.constant 0 : index
    %20 = vector.load %arg4[%c0_7, %c0_8] : memref<1x256xf32, #tpu.memory_space<vmem>>, vector<1x256xf32>
    %21 = vector.broadcast %20 : vector<1x256xf32> to vector<64x256xf32>
    %22 = arith.addf %19, %21 : vector<64x256xf32>
    %c0_9 = arith.constant 0 : index
    %c0_10 = arith.constant 0 : index
    %23 = vector.load %arg5[%c0_9, %c0_10] : memref<256x128xf32, #tpu.memory_space<vmem>>, vector<256x128xf32>
    %cst_11 = arith.constant dense<0.000000e+00> : vector<64x128xf32>
    %24 = tpu.matmul %22, %23, %cst_11 {dimension_numbers = #tpu.dot_dimension_numbers<[1], [0], [0], [1], [0, 0, 1, 1], [], []>} : vector<64x256xf32>, vector<256x128xf32>, vector<64x128xf32> -> vector<64x128xf32>
    %c0_12 = arith.constant 0 : index
    %c0_13 = arith.constant 0 : index
    %25 = vector.load %arg6[%c0_12, %c0_13] : memref<1x128xf32, #tpu.memory_space<vmem>>, vector<1x128xf32>
    %26 = vector.broadcast %25 : vector<1x128xf32> to vector<64x128xf32>
    %27 = arith.addf %24, %26 : vector<64x128xf32>
    %cst_14 = arith.constant 0.000000e+00 : f32
    %28 = vector.broadcast %cst_14 : f32 to vector<64x128xf32>
    %29 = arith.maximumf %27, %28 : vector<64x128xf32>
    %c0_15 = arith.constant 0 : index
    %c0_16 = arith.constant 0 : index
    %30 = vector.load %arg7[%c0_15, %c0_16] : memref<128x256xf32, #tpu.memory_space<vmem>>, vector<128x256xf32>
    %cst_17 = arith.constant dense<0.000000e+00> : vector<64x256xf32>
    %31 = tpu.matmul %29, %30, %cst_17 {dimension_numbers = #tpu.dot_dimension_numbers<[1], [0], [0], [1], [0, 0, 1, 1], [], []>} : vector<64x128xf32>, vector<128x256xf32>, vector<64x256xf32> -> vector<64x256xf32>
    %c0_18 = arith.constant 0 : index
    %c0_19 = arith.constant 0 : index
    %32 = vector.load %arg8[%c0_18, %c0_19] : memref<1x256xf32, #tpu.memory_space<vmem>>, vector<1x256xf32>
    %33 = vector.broadcast %32 : vector<1x256xf32> to vector<64x256xf32>
    %34 = arith.addf %31, %33 : vector<64x256xf32>
    %c0_20 = arith.constant 0 : index
    %c0_21 = arith.constant 0 : index
    %35 = vector.load %arg2[%c0_20, %c0_21] : memref<64x256xf32, #tpu.memory_space<vmem>>, vector<64x256xf32>
    %36 = arith.addf %34, %35 : vector<64x256xf32>
    %c0_22 = arith.constant 0 : index
    %c0_23 = arith.constant 0 : index
    %37 = vector.load %arg9[%c0_22, %c0_23] : memref<64x256xf32, #tpu.memory_space<vmem>>, vector<64x256xf32>
    tpu.vector_store %arg9[%c0_22, %c0_23], %36 {strides = array<i32>} : memref<64x256xf32, #tpu.memory_space<vmem>>, vector<64x256xf32>,
    %c0_24 = arith.constant 0 : index
    %c0_25 = arith.constant 0 : index
    %38 = vector.load %arg10[%c0_24, %c0_25] : memref<64x128xf32, #tpu.memory_space<vmem>>, vector<64x128xf32>
    tpu.vector_store %arg10[%c0_24, %c0_25], %29 {strides = array<i32>} : memref<64x128xf32, #tpu.memory_space<vmem>>, vector<64x128xf32>,
    %c0_26 = arith.constant 0 : index
    %c0_27 = arith.constant 0 : index
    %39 = vector.load %arg11[%c0_26, %c0_27] : memref<64x256xf32, #tpu.memory_space<vmem>>, vector<64x256xf32>
    tpu.vector_store %arg11[%c0_26, %c0_27], %34 {strides = array<i32>} : memref<64x256xf32, #tpu.memory_space<vmem>>, vector<64x256xf32>,
    return
  }
  func.func @transform_0(%arg0: i32) -> (i32, i32) {
    %c0_i32 = arith.constant 0 : i32
    %c0_i32_0 = arith.constant 0 : i32
    return %arg0, %c0_i32 : i32, i32
  }
  func.func @transform_1(%arg0: i32) -> (i32, i32) {
    %c0_i32 = arith.constant 0 : i32
    %c0_i32_0 = arith.constant 0 : i32
    return %arg0, %c0_i32 : i32, i32
  }
  func.func @transform_2(%arg0: i32) -> (i32, i32) {
    %c0_i32 = arith.constant 0 : i32
    %c0_i32_0 = arith.constant 0 : i32
    %c0_i32_1 = arith.constant 0 : i32
    return %c0_i32, %c0_i32_0 : i32, i32
  }
  func.func @transform_3(%arg0: i32) -> (i32, i32) {
    %c0_i32 = arith.constant 0 : i32
    %c0_i32_0 = arith.constant 0 : i32
    %c0_i32_1 = arith.constant 0 : i32
    return %c0_i32, %c0_i32_0 : i32, i32
  }
  func.func @transform_4(%arg0: i32) -> (i32, i32) {
    %c0_i32 = arith.constant 0 : i32
    %c0_i32_0 = arith.constant 0 : i32
    %c0_i32_1 = arith.constant 0 : i32
    return %c0_i32, %c0_i32_0 : i32, i32
  }
  func.func @transform_5(%arg0: i32) -> (i32, i32) {
    %c0_i32 = arith.constant 0 : i32
    %c0_i32_0 = arith.constant 0 : i32
    %c0_i32_1 = arith.constant 0 : i32
    return %c0_i32, %c0_i32_0 : i32, i32
  }
  func.func @transform_6(%arg0: i32) -> (i32, i32) {
    %c0_i32 = arith.constant 0 : i32
    %c0_i32_0 = arith.constant 0 : i32
    %c0_i32_1 = arith.constant 0 : i32
    return %c0_i32, %c0_i32_0 : i32, i32
  }
  func.func @transform_7(%arg0: i32) -> (i32, i32) {
    %c0_i32 = arith.constant 0 : i32
    %c0_i32_0 = arith.constant 0 : i32
    %c0_i32_1 = arith.constant 0 : i32
    return %c0_i32, %c0_i32_0 : i32, i32
  }
  func.func @transform_8(%arg0: i32) -> (i32, i32) {
    %c0_i32 = arith.constant 0 : i32
    %c0_i32_0 = arith.constant 0 : i32
    return %arg0, %c0_i32 : i32, i32
  }
  func.func @transform_9(%arg0: i32) -> (i32, i32) {
    %c0_i32 = arith.constant 0 : i32
    %c0_i32_0 = arith.constant 0 : i32
    return %arg0, %c0_i32 : i32, i32
  }
  func.func @transform_10(%arg0: i32) -> (i32, i32) {
    %c0_i32 = arith.constant 0 : i32
    %c0_i32_0 = arith.constant 0 : i32
    return %arg0, %c0_i32 : i32, i32
  }
}

</mosaic_0001>

<llo_original>
// kernel: tpu_custom_call.1
$region0: #{tpu_custom_call.1}
  #allocation0 [shape = 'u32[]', space=smem, size = 0x4, offset = 0x4, fixed_abs, tag = 'smem constant byte address 0x4 - core index']
  #allocation1 [shape = 'u32[144,128]{1,0:T(1,128)}', space=vmem, size = 0x12000, scoped, tag = 'internal scratch']
  %s0 = inlined_call_operand.hbm [shape: f32[192,256], index: 0, kind: input, shape index: {}]
  %s1 = inlined_call_operand.hbm [shape: f32[192,256], index: 1, kind: input, shape index: {}]
  %s2 = inlined_call_operand.vmem [shape: f32[1,256], index: 2, kind: input, shape index: {}]
  %s3 = inlined_call_operand.vmem [shape: f32[1,256], index: 3, kind: input, shape index: {}]
  %s4 = inlined_call_operand.hbm [shape: f32[256,128], index: 4, kind: input, shape index: {}]
  %s5 = inlined_call_operand.vmem [shape: f32[1,128], index: 5, kind: input, shape index: {}]
  %s6 = inlined_call_operand.hbm [shape: f32[128,256], index: 6, kind: input, shape index: {}]
  %s7 = inlined_call_operand.vmem [shape: f32[1,256], index: 7, kind: input, shape index: {}]
  %s8 = inlined_call_operand.hbm [shape: f32[192,256], index: 8, kind: output, shape index: {0}]
  %s9 = inlined_call_operand.hbm [shape: f32[192,128], index: 9, kind: output, shape index: {1}]
  %s10 = inlined_call_operand.hbm [shape: f32[192,256], index: 10, kind: output, shape index: {2}]
  %11 = xla_tuple %s8, %s9, %s10
  %s12 = sld [smem:[#allocation0]]
  $region97: #{tpu_custom_call.1} parent=0
    _
  %s14 = ssub.s32 1, %s12
  %s15 = scalar_select 0, %s14, %s12
  $region1: #{tpu_custom_call.1} parent=0
    #allocation2 [shape = 'u8[131072]{0}', space=vmem, size = 0x20000, scoped, tag = 'input window, operand 0']
    #allocation3 [shape = 's32[2]{0}', space=sflag, size = 0x8, scoped, tag = 'scoped memory for tpu_custom_call.1']
    #allocation4 [shape = 's32[2]{0}', space=sflag, size = 0x8, scoped, tag = 'scoped memory for tpu_custom_call.1']
    #allocation5 [shape = 'u8[131072]{0}', space=vmem, size = 0x20000, scoped, tag = 'input window, operand 1']
    #allocation6 [shape = 's32[2]{0}', space=sflag, size = 0x8, scoped, tag = 'scoped memory for tpu_custom_call.1']
    #allocation7 [shape = 'u8[131072]{0}', space=vmem, size = 0x20000, scoped, tag = 'input window, operand 4, single buffered']
    #allocation8 [shape = 'u8[131072]{0}', space=vmem, size = 0x20000, scoped, tag = 'input window, operand 6, single buffered']
    #allocation9 [shape = 's32[1]{0}', space=sflag, size = 0x4, scoped, tag = 'scoped memory for tpu_custom_call.1']
    #allocation10 [shape = 'u8[131072]{0}', space=vmem, size = 0x20000, scoped, tag = 'output window, operand 0']
    #allocation11 [shape = 'u8[65536]{0}', space=vmem, size = 0x10000, scoped, tag = 'output window, operand 1']
    #allocation12 [shape = 's32[2]{0}', space=sflag, size = 0x8, scoped, tag = 'scoped memory for tpu_custom_call.1']
    #allocation13 [shape = 'u8[131072]{0}', space=vmem, size = 0x20000, scoped, tag = 'output window, operand 2']
    %16 = vsyncpa [#allocation3], 0
    %s17 = scalar_lea.sflag [#allocation3], 1
    %18 = vsyncpa %s17, 0
    %19 = vsyncpa [#allocation6], 0
    %s20 = scalar_lea.sflag [#allocation6], 1
    %21 = vsyncpa %s20, 0
    %22 = vsyncpa [#allocation9], 0
    %23 = vsyncpa [#allocation4], 0
    %s24 = scalar_lea.sflag [#allocation4], 1
    %25 = vsyncpa %s24, 0
    %26 = vsyncpa [#allocation12], 0
    %s27 = scalar_lea.sflag [#allocation12], 1
    %28 = vsyncpa %s27, 0
    loop: start=0, step=1, limit=5
    $region2: #{tpu_custom_call.1} parent=1 // loop_pre_header
      _
    $region3: #{tpu_custom_call.1} parent=1 // loop_header
      %s30 = sphi 0, %s34
      %p31 = scmp.ge.s32.totalorder %s30, 5
      %s40 = sphi 0, %s42
      %s43 = sphi 0, %s40
      %s44 = sphi 0, %s43
      %s60 = sphi 0, %s44
      %s66 = sphi 0, %s68
      %s69 = sphi 0, %s66
      %s70 = sphi 0, %s69
      %s86 = sphi 0, %s70
      %s90 = sphi 0, %s90
      %s92 = sphi 0, %s90
      %s93 = sphi 0, %s92
      %s107 = sphi 0, %s93
      %s111 = sphi 0, %s111
      %s113 = sphi 0, %s111
      %s114 = sphi 0, %s113
      %s128 = sphi 0, %s114
      %s132 = sphi 0, %s132
      %s134 = sphi 0, %s132
      %s135 = sphi 0, %s134
      %s149 = sphi 0, %s135
      %s153 = sphi 0, %s153
      %s155 = sphi 0, %s153
      %s156 = sphi 0, %s155
      %s170 = sphi 0, %s156
      %s174 = sphi 0, %s174
      %s176 = sphi 0, %s174
      %s177 = sphi 0, %s176
      %s191 = sphi 0, %s177
      %s195 = sphi 0, %s195
      %s197 = sphi 0, %s195
      %s198 = sphi 0, %s197
      %s212 = sphi 0, %s198
      %s218 = sphi 0, %s220
      %s221 = sphi 0, %s218
      %s222 = sphi 0, %s221
      %s238 = sphi 0, %s222
      %s244 = sphi 0, %s246
      %s247 = sphi 0, %s244
      %s248 = sphi 0, %s247
      %s264 = sphi 0, %s248
      %s270 = sphi 0, %s272
      %s273 = sphi 0, %s270
      %s274 = sphi 0, %s273
      %s290 = sphi 0, %s274
    $region4: #{tpu_custom_call.1} parent=1 // loop_header_branch
      %33 = sbr.rel (%p31) target = $region8
    $region5: #{tpu_custom_call.1} parent=1 // loop_body
      %s35 = ssub.s32 %s30, 1
      %s36 = ssub.s32 %s30, 2
      %s37 = sadd.s32 %s30, 1
      %s38 = ssub.s32 %s30, %s37
      %p39 = scmp.eq.s32.totalorder %s38, 0
      %s41 = sadd.s32 %s40, 1
      %s42 = scalar_select %p39, %s40, %s41
      %p45 = pneg %p39
      %p46 = scmp.eq.s32.totalorder %s30, 2
      %p47 = por %p45, %p46
      %p48 = scmp.ne.s32.totalorder %s40, %s43
      %p49 = scmp.eq.s32.totalorder %s30, 0
      %p50 = por %p48, %p49
      %p51 = scmp.ne.s32.totalorder %s40, %s43
      %p52 = scmp.eq.s32.totalorder %s35, 2
      %p53 = por %p51, %p52
      %p54 = scmp.ne.s32.totalorder %s43, %s44
      %p55 = scmp.eq.s32.totalorder %s35, 0
      %p56 = por %p54, %p55
      %p57 = scmp.ne.s32.totalorder %s43, %s44
      %p58 = scmp.eq.s32.totalorder %s36, 2
      %p59 = por %p57, %p58
      %p61 = scmp.ne.s32.totalorder %s44, %s60
      %p62 = scmp.eq.s32.totalorder %s36, 0
      %p63 = por %p61, %p62
      %s64 = ssub.s32 %s30, %s37
      %p65 = scmp.eq.s32.totalorder %s64, 0
      %s67 = sadd.s32 %s66, 1
      %s68 = scalar_select %p65, %s66, %s67
      %p71 = pneg %p65
      %p72 = scmp.eq.s32.totalorder %s30, 2
      %p73 = por %p71, %p72
      %p74 = scmp.ne.s32.totalorder %s66, %s69
      %p75 = scmp.eq.s32.totalorder %s30, 0
      %p76 = por %p74, %p75
      %p77 = scmp.ne.s32.totalorder %s66, %s69
      %p78 = scmp.eq.s32.totalorder %s35, 2
      %p79 = por %p77, %p78
      %p80 = scmp.ne.s32.totalorder %s69, %s70
      %p81 = scmp.eq.s32.totalorder %s35, 0
      %p82 = por %p80, %p81
      %p83 = scmp.ne.s32.totalorder %s69, %s70
      %p84 = scmp.eq.s32.totalorder %s36, 2
      %p85 = por %p83, %p84
      %p87 = scmp.ne.s32.totalorder %s70, %s86
      %p88 = scmp.eq.s32.totalorder %s36, 0
      %p89 = por %p87, %p88
      %s91 = sadd.s32 %s90, 1
      %p94 = scmp.eq.s32.totalorder %s30, 2
      %p95 = scmp.ne.s32.totalorder %s90, %s92
      %p96 = scmp.eq.s32.totalorder %s30, 0
      %p97 = por %p95, %p96
      %p98 = scmp.ne.s32.totalorder %s90, %s92
      %p99 = scmp.eq.s32.totalorder %s35, 2
      %p100 = por %p98, %p99
      %p101 = scmp.ne.s32.totalorder %s92, %s93
      %p102 = scmp.eq.s32.totalorder %s35, 0
      %p103 = por %p101, %p102
      %p104 = scmp.ne.s32.totalorder %s92, %s93
      %p105 = scmp.eq.s32.totalorder %s36, 2
      %p106 = por %p104, %p105
      %p108 = scmp.ne.s32.totalorder %s93, %s107
      %p109 = scmp.eq.s32.totalorder %s36, 0
      %p110 = por %p108, %p109
      %s112 = sadd.s32 %s111, 1
      %p115 = scmp.eq.s32.totalorder %s30, 2
      %p116 = scmp.ne.s32.totalorder %s111, %s113
      %p117 = scmp.eq.s32.totalorder %s30, 0
      %p118 = por %p116, %p117
      %p119 = scmp.ne.s32.totalorder %s111, %s113
      %p120 = scmp.eq.s32.totalorder %s35, 2
      %p121 = por %p119, %p120
      %p122 = scmp.ne.s32.totalorder %s113, %s114
      %p123 = scmp.eq.s32.totalorder %s35, 0
      %p124 = por %p122, %p123
      %p125 = scmp.ne.s32.totalorder %s113, %s114
      %p126 = scmp.eq.s32.totalorder %s36, 2
      %p127 = por %p125, %p126
      %p129 = scmp.ne.s32.totalorder %s114, %s128
      %p130 = scmp.eq.s32.totalorder %s36, 0
      %p131 = por %p129, %p130
      %s133 = sadd.s32 %s132, 1
      %p136 = scmp.eq.s32.totalorder %s30, 2
      %p137 = scmp.ne.s32.totalorder %s132, %s134
      %p138 = scmp.eq.s32.totalorder %s30, 0
      %p139 = por %p137, %p138
      %p140 = scmp.ne.s32.totalorder %s132, %s134
      %p141 = scmp.eq.s32.totalorder %s35, 2
      %p142 = por %p140, %p141
      %p143 = scmp.ne.s32.totalorder %s134, %s135
      %p144 = scmp.eq.s32.totalorder %s35, 0
      %p145 = por %p143, %p144
      %p146 = scmp.ne.s32.totalorder %s134, %s135
      %p147 = scmp.eq.s32.totalorder %s36, 2
      %p148 = por %p146, %p147
      %p150 = scmp.ne.s32.totalorder %s135, %s149
      %p151 = scmp.eq.s32.totalorder %s36, 0
      %p152 = por %p150, %p151
      %s154 = sadd.s32 %s153, 1
      %p157 = scmp.eq.s32.totalorder %s30, 2
      %p158 = scmp.ne.s32.totalorder %s153, %s155
      %p159 = scmp.eq.s32.totalorder %s30, 0
      %p160 = por %p158, %p159
      %p161 = scmp.ne.s32.totalorder %s153, %s155
      %p162 = scmp.eq.s32.totalorder %s35, 2
      %p163 = por %p161, %p162
      %p164 = scmp.ne.s32.totalorder %s155, %s156
      %p165 = scmp.eq.s32.totalorder %s35, 0
      %p166 = por %p164, %p165
      %p167 = scmp.ne.s32.totalorder %s155, %s156
      %p168 = scmp.eq.s32.totalorder %s36, 2
      %p169 = por %p167, %p168
      %p171 = scmp.ne.s32.totalorder %s156, %s170
      %p172 = scmp.eq.s32.totalorder %s36, 0
      %p173 = por %p171, %p172
      %s175 = sadd.s32 %s174, 1
      %p178 = scmp.eq.s32.totalorder %s30, 2
      %p179 = scmp.ne.s32.totalorder %s174, %s176
      %p180 = scmp.eq.s32.totalorder %s30, 0
      %p181 = por %p179, %p180
      %p182 = scmp.ne.s32.totalorder %s174, %s176
      %p183 = scmp.eq.s32.totalorder %s35, 2
      %p184 = por %p182, %p183
      %p185 = scmp.ne.s32.totalorder %s176, %s177
      %p186 = scmp.eq.s32.totalorder %s35, 0
      %p187 = por %p185, %p186
      %p188 = scmp.ne.s32.totalorder %s176, %s177
      %p189 = scmp.eq.s32.totalorder %s36, 2
      %p190 = por %p188, %p189
      %p192 = scmp.ne.s32.totalorder %s177, %s191
      %p193 = scmp.eq.s32.totalorder %s36, 0
      %p194 = por %p192, %p193
      %s196 = sadd.s32 %s195, 1
      %p199 = scmp.eq.s32.totalorder %s30, 2
      %p200 = scmp.ne.s32.totalorder %s195, %s197
      %p201 = scmp.eq.s32.totalorder %s30, 0
      %p202 = por %p200, %p201
      %p203 = scmp.ne.s32.totalorder %s195, %s197
      %p204 = scmp.eq.s32.totalorder %s35, 2
      %p205 = por %p203, %p204
      %p206 = scmp.ne.s32.totalorder %s197, %s198
      %p207 = scmp.eq.s32.totalorder %s35, 0
      %p208 = por %p206, %p207
      %p209 = scmp.ne.s32.totalorder %s197, %s198
      %p210 = scmp.eq.s32.totalorder %s36, 2
      %p211 = por %p209, %p210
      %p213 = scmp.ne.s32.totalorder %s198, %s212
      %p214 = scmp.eq.s32.totalorder %s36, 0
      %p215 = por %p213, %p214
      %s216 = ssub.s32 %s30, %s37
      %p217 = scmp.eq.s32.totalorder %s216, 0
      %s219 = sadd.s32 %s218, 1
      %s220 = scalar_select %p217, %s218, %s219
      %p223 = pneg %p217
      %p224 = scmp.eq.s32.totalorder %s30, 2
      %p225 = por %p223, %p224
      %p226 = scmp.ne.s32.totalorder %s218, %s221
      %p227 = scmp.eq.s32.totalorder %s30, 0
      %p228 = por %p226, %p227
      %p229 = scmp.ne.s32.totalorder %s218, %s221
      %p230 = scmp.eq.s32.totalorder %s35, 2
      %p231 = por %p229, %p230
      %p232 = scmp.ne.s32.totalorder %s221, %s222
      %p233 = scmp.eq.s32.totalorder %s35, 0
      %p234 = por %p232, %p233
      %p235 = scmp.ne.s32.totalorder %s221, %s222
      %p236 = scmp.eq.s32.totalorder %s36, 2
      %p237 = por %p235, %p236
      %p239 = scmp.ne.s32.totalorder %s222, %s238
      %p240 = scmp.eq.s32.totalorder %s36, 0
      %p241 = por %p239, %p240
      %s242 = ssub.s32 %s30, %s37
      %p243 = scmp.eq.s32.totalorder %s242, 0
      %s245 = sadd.s32 %s244, 1
      %s246 = scalar_select %p243, %s244, %s245
      %p249 = pneg %p243
      %p250 = scmp.eq.s32.totalorder %s30, 2
      %p251 = por %p249, %p250
      %p252 = scmp.ne.s32.totalorder %s244, %s247
      %p253 = scmp.eq.s32.totalorder %s30, 0
      %p254 = por %p252, %p253
      %p255 = scmp.ne.s32.totalorder %s244, %s247
      %p256 = scmp.eq.s32.totalorder %s35, 2
      %p257 = por %p255, %p256
      %p258 = scmp.ne.s32.totalorder %s247, %s248
      %p259 = scmp.eq.s32.totalorder %s35, 0
      %p260 = por %p258, %p259
      %p261 = scmp.ne.s32.totalorder %s247, %s248
      %p262 = scmp.eq.s32.totalorder %s36, 2
      %p263 = por %p261, %p262
      %p265 = scmp.ne.s32.totalorder %s248, %s264
      %p266 = scmp.eq.s32.totalorder %s36, 0
      %p267 = por %p265, %p266
      %s268 = ssub.s32 %s30, %s37
      %p269 = scmp.eq.s32.totalorder %s268, 0
      %s271 = sadd.s32 %s270, 1
      %s272 = scalar_select %p269, %s270, %s271
      %p275 = pneg %p269
      %p276 = scmp.eq.s32.totalorder %s30, 2
      %p277 = por %p275, %p276
      %p278 = scmp.ne.s32.totalorder %s270, %s273
      %p279 = scmp.eq.s32.totalorder %s30, 0
      %p280 = por %p278, %p279
      %p281 = scmp.ne.s32.totalorder %s270, %s273
      %p282 = scmp.eq.s32.totalorder %s35, 2
      %p283 = por %p281, %p282
      %p284 = scmp.ne.s32.totalorder %s273, %s274
      %p285 = scmp.eq.s32.totalorder %s35, 0
      %p286 = por %p284, %p285
      %p287 = scmp.ne.s32.totalorder %s273, %s274
      %p288 = scmp.eq.s32.totalorder %s36, 2
      %p289 = por %p287, %p288
      %p291 = scmp.ne.s32.totalorder %s274, %s290
      %p292 = scmp.eq.s32.totalorder %s36, 0
      %p293 = por %p291, %p292
      %p294 = scmp.le.s32.totalorder 1, %s30
      %p295 = scmp.lt.s32.totalorder %s30, 4
      %p296 = pnand %p294, %p295
      %p297 = pneg %p296
      // Predicated region
      $region9: #{tpu_custom_call.1} parent=5 // pred_check
        _
      $region10: #{tpu_custom_call.1} parent=5 // pred_check_branch
        %299 = sbr.rel (%p296) target = $region12
      $region11: #{tpu_custom_call.1} parent=5 // pred_region
        %s300 = ssub.s32 %s30, 1
        // Predicated region
        $region13: #{tpu_custom_call.1} parent=11 // pred_check
          %p301 = pneg %p103
        $region14: #{tpu_custom_call.1} parent=11 // pred_check_branch
          %303 = sbr.rel (%p301) target = $region16
        $region15: #{tpu_custom_call.1} parent=11 // pred_region
          _
        $region16: #{tpu_custom_call.1} parent=11 // pred_fallthru
          _
        // Predicated region
        $region17: #{tpu_custom_call.1} parent=11 // pred_check
          %p304 = pneg %p124
        $region18: #{tpu_custom_call.1} parent=11 // pred_check_branch
          %306 = sbr.rel (%p304) target = $region20
        $region19: #{tpu_custom_call.1} parent=11 // pred_region
          _
        $region20: #{tpu_custom_call.1} parent=11 // pred_fallthru
          _
        // Predicated region
        $region21: #{tpu_custom_call.1} parent=11 // pred_check
          %p307 = pneg %p145
        $region22: #{tpu_custom_call.1} parent=11 // pred_check_branch
          %309 = sbr.rel (%p307) target = $region24
        $region23: #{tpu_custom_call.1} parent=11 // pred_region
          %s311 = ssub.s32 4096, 4096
          %312 = vsyncadd [#allocation6], %s311
          %s313 = sshll.u32 [#allocation7], 4
          %s314 = int_to_ptr.vmem [resolvable:$true] %s313
          %319 = dma.hbm_to_vmem [thread:$0]  %s4, 4096, %s314, [#allocation6], 128, 128, 8
        $region24: #{tpu_custom_call.1} parent=11 // pred_fallthru
          _
        // Predicated region
        $region25: #{tpu_custom_call.1} parent=11 // pred_check
          %p320 = pneg %p166
        $region26: #{tpu_custom_call.1} parent=11 // pred_check_branch
          %322 = sbr.rel (%p320) target = $region28
        $region27: #{tpu_custom_call.1} parent=11 // pred_region
          _
        $region28: #{tpu_custom_call.1} parent=11 // pred_fallthru
          _
        // Predicated region
        $region29: #{tpu_custom_call.1} parent=11 // pred_check
          %p323 = pneg %p187
        $region30: #{tpu_custom_call.1} parent=11 // pred_check_branch
          %325 = sbr.rel (%p323) target = $region32
        $region31: #{tpu_custom_call.1} parent=11 // pred_region
          %s327 = ssub.s32 4096, 4096
          %328 = vsyncadd [#allocation9], %s327
          %s329 = sshll.u32 [#allocation8], 4
          %s330 = int_to_ptr.vmem [resolvable:$true] %s329
          %335 = dma.hbm_to_vmem [thread:$0]  %s6, 4096, %s330, [#allocation9], 256, 256, 16
        $region32: #{tpu_custom_call.1} parent=11 // pred_fallthru
          _
        // Predicated region
        $region33: #{tpu_custom_call.1} parent=11 // pred_check
          %p336 = pneg %p208
        $region34: #{tpu_custom_call.1} parent=11 // pred_check_branch
          %338 = sbr.rel (%p336) target = $region36
        $region35: #{tpu_custom_call.1} parent=11 // pred_region
          _
        $region36: #{tpu_custom_call.1} parent=11 // pred_fallthru
          _
      $region12: #{tpu_custom_call.1} parent=5 // pred_fallthru
        _
      %p339 = scmp.lt.s32.totalorder %s30, 3
      // Predicated region
      $region37: #{tpu_custom_call.1} parent=5 // pred_check
        %p340 = pneg %p339
      $region38: #{tpu_custom_call.1} parent=5 // pred_check_branch
        %342 = sbr.rel (%p340) target = $region40
      $region39: #{tpu_custom_call.1} parent=5 // pred_region
        // Predicated region
        $region41: #{tpu_custom_call.1} parent=39 // pred_check
          %p343 = pneg %p50
        $region42: #{tpu_custom_call.1} parent=39 // pred_check_branch
          %345 = sbr.rel (%p343) target = $region44
        $region43: #{tpu_custom_call.1} parent=39 // pred_region
          %s346 = sand.u32 %s40, 1
          %s347 = scalar_lea.sflag [#allocation3], %s346
          %s348 = sand.u32 %s40, 1
          %s349 = smul.addr %s348, 128
          %s350 = scalar_lea.vmem [#allocation2], %s349
          %s351 = smul.u32 8, %s30
          %s353 = ssub.s32 2048, 2048
          %354 = vsyncadd %s347, %s353
          %s355 = smul.addr %s351, 2
          %s356 = smul.addr %s355, 128
          %s357 = scalar_lea.hbm %s0, %s356
          %s358 = sshll.u32 %s350, 4
          %s359 = int_to_ptr.vmem [resolvable:$true] %s358
          %364 = dma.hbm_to_vmem [thread:$0]  %s357, 2048, %s359, %s347, 256, 256, 16
        $region44: #{tpu_custom_call.1} parent=39 // pred_fallthru
          _
        // Predicated region
        $region45: #{tpu_custom_call.1} parent=39 // pred_check
          %p365 = pneg %p76
        $region46: #{tpu_custom_call.1} parent=39 // pred_check_branch
          %367 = sbr.rel (%p365) target = $region48
        $region47: #{tpu_custom_call.1} parent=39 // pred_region
          %s368 = sand.u32 %s30, 1
          %s369 = scalar_lea.sflag [#allocation6], %s368
          %s370 = sand.u32 %s66, 1
          %s371 = smul.addr %s370, 128
          %s372 = scalar_lea.vmem [#allocation5], %s371
          %s373 = smul.u32 8, %s30
          %s375 = ssub.s32 2048, 2048
          %376 = vsyncadd %s369, %s375
          %s377 = smul.addr %s373, 2
          %s378 = smul.addr %s377, 128
          %s379 = scalar_lea.hbm %s1, %s378
          %s380 = sshll.u32 %s372, 4
          %s381 = int_to_ptr.vmem [resolvable:$true] %s380
          %386 = dma.hbm_to_vmem [thread:$0]  %s379, 2048, %s381, %s369, 256, 256, 16
        $region48: #{tpu_custom_call.1} parent=39 // pred_fallthru
          _
      $region40: #{tpu_custom_call.1} parent=5 // pred_fallthru
        _
      %p387 = scmp.le.s32.totalorder 1, %s30
      %p388 = scmp.lt.s32.totalorder %s30, 4
      %p389 = pnand %p387, %p388
      %p390 = pneg %p389
      // Predicated region
      $region49: #{tpu_custom_call.1} parent=5 // pred_check
        _
      $region50: #{tpu_custom_call.1} parent=5 // pred_check_branch
        %392 = sbr.rel (%p389) target = $region52
      $region51: #{tpu_custom_call.1} parent=5 // pred_region
        %s393 = ssub.s32 %s30, 1
        %s394 = sand.u32 %s43, 1
        %s395 = scalar_lea.sflag [#allocation3], %s394
        %s396 = sand.u32 %s43, 1
        %s397 = smul.addr %s396, 128
        %s398 = scalar_lea.vmem [#allocation2], %s397
        // Predicated region
        $region53: #{tpu_custom_call.1} parent=51 // pred_check
          %p399 = pneg %p56
        $region54: #{tpu_custom_call.1} parent=51 // pred_check_branch
          %401 = sbr.rel (%p399) target = $region56
        $region55: #{tpu_custom_call.1} parent=51 // pred_region
          %402 = dma.done %s395, 2048
        $region56: #{tpu_custom_call.1} parent=51 // pred_fallthru
          _
        %s403 = sand.u32 %s35, 1
        %s404 = scalar_lea.sflag [#allocation6], %s403
        %s405 = sand.u32 %s69, 1
        %s406 = smul.addr %s405, 128
        %s407 = scalar_lea.vmem [#allocation5], %s406
        // Predicated region
        $region57: #{tpu_custom_call.1} parent=51 // pred_check
          %p408 = pneg %p82
        $region58: #{tpu_custom_call.1} parent=51 // pred_check_branch
          %410 = sbr.rel (%p408) target = $region60
        $region59: #{tpu_custom_call.1} parent=51 // pred_region
          %411 = dma.done %s404, 2048
        $region60: #{tpu_custom_call.1} parent=51 // pred_fallthru
          _
        // Predicated region
        $region61: #{tpu_custom_call.1} parent=51 // pred_check
          %p412 = pneg %p145
        $region62: #{tpu_custom_call.1} parent=51 // pred_check_branch
          %414 = sbr.rel (%p412) target = $region64
        $region63: #{tpu_custom_call.1} parent=51 // pred_region
          %415 = dma.done [#allocation6], 4096
        $region64: #{tpu_custom_call.1} parent=51 // pred_fallthru
          _
        // Predicated region
        $region65: #{tpu_custom_call.1} parent=51 // pred_check
          %p416 = pneg %p187
        $region66: #{tpu_custom_call.1} parent=51 // pred_check_branch
          %418 = sbr.rel (%p416) target = $region68
        $region67: #{tpu_custom_call.1} parent=51 // pred_region
          %419 = dma.done [#allocation9], 4096
        $region68: #{tpu_custom_call.1} parent=51 // pred_fallthru
          _
        %s420 = sand.u32 %s43, 1
        %s421 = scalar_lea.sflag [#allocation3], %s420
        %s422 = sand.u32 %s43, 1
        %s423 = smul.addr %s422, 128
        %s424 = scalar_lea.vmem [#allocation2], %s423
        %p425 = pneg %p56
        %p426 = pneg %p53
        %s427 = sand.u32 %s35, 1
        %s428 = scalar_lea.sflag [#allocation6], %s427
        %s429 = sand.u32 %s69, 1
        %s430 = smul.addr %s429, 128
        %s431 = scalar_lea.vmem [#allocation5], %s430
        %p432 = pneg %p82
        %p433 = pneg %p79
        %p434 = pneg %p103
        %p435 = pneg %p100
        %p436 = pneg %p124
        %p437 = pneg %p121
        %p438 = pneg %p145
        %p439 = pneg %p142
        %p440 = pneg %p166
        %p441 = pneg %p163
        %p442 = pneg %p187
        %p443 = pneg %p184
        %p444 = pneg %p208
        %p445 = pneg %p205
        %p446 = pneg %p234
        %p447 = pneg %p231
        %s448 = sand.u32 %s221, 1
        %s449 = scalar_lea.sflag [#allocation4], %s448
        %s450 = sand.u32 %s221, 1
        %s451 = smul.addr %s450, 128
        %s452 = scalar_lea.vmem [#allocation10], %s451
        %p453 = pneg %p260
        %p454 = pneg %p257
        %s455 = sand.u32 %s35, 1
        %s456 = scalar_lea.sflag [#allocation12], %s455
        %s457 = sand.u32 %s247, 1
        %s458 = smul.addr %s457, 64
        %s459 = scalar_lea.vmem [#allocation11], %s458
        %p460 = pneg %p286
        %p461 = pneg %p283
        %s462 = sand.u32 %s35, 1
        %s463 = scalar_lea.sflag [#allocation12], %s462
        %s464 = sand.u32 %s273, 1
        %s465 = smul.addr %s464, 128
        %s466 = scalar_lea.vmem [#allocation13], %s465
        %s467 = smul.u32 8, %s35
        %s468 = smul.u32 8, %s35
        %s469 = smul.u32 8, %s35
        %s470 = smul.u32 8, %s35
        %s471 = smul.u32 8, %s35
        %v472 = vld [vmem:[%s398] sm:$0xff]
        %v473 = vld [vmem:[%s398 + $0x8] sm:$0xff]
        %v474 = vld [vmem:[%s398 + $0x10] sm:$0xff]
        %v475 = vld [vmem:[%s398 + $0x18] sm:$0xff]
        %v476 = vld [vmem:[%s398 + $0x20] sm:$0xff]
        %v477 = vld [vmem:[%s398 + $0x28] sm:$0xff]
        %v478 = vld [vmem:[%s398 + $0x30] sm:$0xff]
        %v479 = vld [vmem:[%s398 + $0x38] sm:$0xff]
        %v480 = vld [vmem:[%s398 + $0x40] sm:$0xff]
        %v481 = vld [vmem:[%s398 + $0x48] sm:$0xff]
        %v482 = vld [vmem:[%s398 + $0x50] sm:$0xff]
        %v483 = vld [vmem:[%s398 + $0x58] sm:$0xff]
        %v484 = vld [vmem:[%s398 + $0x60] sm:$0xff]
        %v485 = vld [vmem:[%s398 + $0x68] sm:$0xff]
        %v486 = vld [vmem:[%s398 + $0x70] sm:$0xff]
        %v487 = vld [vmem:[%s398 + $0x78] sm:$0xff]
        %v488 = vadd.f32 %v472, %v473
        %489 = vadd.xlane.f32.xlu0 %v488
        %v490 = vpop.xlane.xlu0 %489
        %v491 = vadd.f32 %v474, %v475
        %492 = vadd.xlane.f32.xlu0 %v491
        %v493 = vpop.xlane.xlu0 %492
        %v494 = vadd.f32 %v476, %v477
        %495 = vadd.xlane.f32.xlu0 %v494
        %v496 = vpop.xlane.xlu0 %495
        %v497 = vadd.f32 %v478, %v479
        %498 = vadd.xlane.f32.xlu0 %v497
        %v499 = vpop.xlane.xlu0 %498
        %v500 = vadd.f32 %v480, %v481
        %501 = vadd.xlane.f32.xlu0 %v500
        %v502 = vpop.xlane.xlu0 %501
        %v503 = vadd.f32 %v482, %v483
        %504 = vadd.xlane.f32.xlu0 %v503
        %v505 = vpop.xlane.xlu0 %504
        %v506 = vadd.f32 %v484, %v485
        %507 = vadd.xlane.f32.xlu0 %v506
        %v508 = vpop.xlane.xlu0 %507
        %v509 = vadd.f32 %v486, %v487
        %510 = vadd.xlane.f32.xlu0 %v509
        %v511 = vpop.xlane.xlu0 %510
        %v512 = vrcp.pop 256.0
        %v513 = vmul.f32 %v490, %v512
        %v514 = vmul.f32 %v493, %v512
        %v515 = vmul.f32 %v496, %v512
        %v516 = vmul.f32 %v499, %v512
        %v517 = vmul.f32 %v502, %v512
        %v518 = vmul.f32 %v505, %v512
        %v519 = vmul.f32 %v508, %v512
        %v520 = vmul.f32 %v511, %v512
        %v521 = vsub.f32 %v472, %v513
        %v522 = vsub.f32 %v473, %v513
        %v523 = vsub.f32 %v474, %v514
        %v524 = vsub.f32 %v475, %v514
        %v525 = vsub.f32 %v476, %v515
        %v526 = vsub.f32 %v477, %v515
        %v527 = vsub.f32 %v478, %v516
        %v528 = vsub.f32 %v479, %v516
        %v529 = vsub.f32 %v480, %v517
        %v530 = vsub.f32 %v481, %v517
        %v531 = vsub.f32 %v482, %v518
        %v532 = vsub.f32 %v483, %v518
        %v533 = vsub.f32 %v484, %v519
        %v534 = vsub.f32 %v485, %v519
        %v535 = vsub.f32 %v486, %v520
        %v536 = vsub.f32 %v487, %v520
        %v537 = vmul.f32 %v521, %v521
        %v538 = vmul.f32 %v522, %v522
        %v539 = vmul.f32 %v523, %v523
        %v540 = vmul.f32 %v524, %v524
        %v541 = vmul.f32 %v525, %v525
        %v542 = vmul.f32 %v526, %v526
        %v543 = vmul.f32 %v527, %v527
        %v544 = vmul.f32 %v528, %v528
        %v545 = vmul.f32 %v529, %v529
        %v546 = vmul.f32 %v530, %v530
        %v547 = vmul.f32 %v531, %v531
        %v548 = vmul.f32 %v532, %v532
        %v549 = vmul.f32 %v533, %v533
        %v550 = vmul.f32 %v534, %v534
        %v551 = vmul.f32 %v535, %v535
        %v552 = vmul.f32 %v536, %v536
        %v553 = vadd.f32 %v537, %v538
        %554 = vadd.xlane.f32.xlu0 %v553
        %v555 = vpop.xlane.xlu0 %554
        %v556 = vadd.f32 %v539, %v540
        %557 = vadd.xlane.f32.xlu0 %v556
        %v558 = vpop.xlane.xlu0 %557
        %v559 = vadd.f32 %v541, %v542
        %560 = vadd.xlane.f32.xlu0 %v559
        %v561 = vpop.xlane.xlu0 %560
        %v562 = vadd.f32 %v543, %v544
        %563 = vadd.xlane.f32.xlu0 %v562
        %v564 = vpop.xlane.xlu0 %563
        %v565 = vadd.f32 %v545, %v546
        %566 = vadd.xlane.f32.xlu0 %v565
        %v567 = vpop.xlane.xlu0 %566
        %v568 = vadd.f32 %v547, %v548
        %569 = vadd.xlane.f32.xlu0 %v568
        %v570 = vpop.xlane.xlu0 %569
        %v571 = vadd.f32 %v549, %v550
        %572 = vadd.xlane.f32.xlu0 %v571
        %v573 = vpop.xlane.xlu0 %572
        %v574 = vadd.f32 %v551, %v552
        %575 = vadd.xlane.f32.xlu0 %v574
        %v576 = vpop.xlane.xlu0 %575
        %v577 = vmul.f32 %v555, %v512
        %v578 = vmul.f32 %v558, %v512
        %v579 = vmul.f32 %v561, %v512
        %v580 = vmul.f32 %v564, %v512
        %v581 = vmul.f32 %v567, %v512
        %v582 = vmul.f32 %v570, %v512
        %v583 = vmul.f32 %v573, %v512
        %v584 = vmul.f32 %v576, %v512
        %v585 = vadd.f32 %v577, 1e-05
        %v586 = vadd.f32 %v578, 1e-05
        %v587 = vadd.f32 %v579, 1e-05
        %v588 = vadd.f32 %v580, 1e-05
        %v589 = vadd.f32 %v581, 1e-05
        %v590 = vadd.f32 %v582, 1e-05
        %v591 = vadd.f32 %v583, 1e-05
        %v592 = vadd.f32 %v584, 1e-05
        %v593 = vrsqrt.pop %v585
        %v594 = vrsqrt.pop %v586
        %v595 = vrsqrt.pop %v587
        %v596 = vrsqrt.pop %v588
        %v597 = vrsqrt.pop %v589
        %v598 = vrsqrt.pop %v590
        %v599 = vrsqrt.pop %v591
        %v600 = vrsqrt.pop %v592
        %v601 = vmul.f32 %v521, %v593
        %v602 = vmul.f32 %v522, %v593
        %v603 = vmul.f32 %v523, %v594
        %v604 = vmul.f32 %v524, %v594
        %v605 = vmul.f32 %v525, %v595
        %v606 = vmul.f32 %v526, %v595
        %v607 = vmul.f32 %v527, %v596
        %v608 = vmul.f32 %v528, %v596
        %v609 = vmul.f32 %v529, %v597
        %v610 = vmul.f32 %v530, %v597
        %v611 = vmul.f32 %v531, %v598
        %v612 = vmul.f32 %v532, %v598
        %v613 = vmul.f32 %v533, %v599
        %v614 = vmul.f32 %v534, %v599
        %v615 = vmul.f32 %v535, %v600
        %v616 = vmul.f32 %v536, %v600
        %v617 = vld [vmem:[%s2] sm:$0x3]
        %v619 = vlaneseq
        %v620 = vshrl.u32 %v619, 7
        %v621 = vsub.s32 0, %v620
        %v622 = vrot.slane %v617, %v621
        %v623 = vlaneseq
        %v624 = vshrl.u32 %v623, 7
        %v625 = vsub.s32 1, %v624
        %v626 = vrot.slane %v617, %v625
        %v629 = vmul.f32 %v601, %v622
        %v630 = vmul.f32 %v602, %v626
        %v631 = vmul.f32 %v603, %v622
        %v632 = vmul.f32 %v604, %v626
        %v633 = vmul.f32 %v605, %v622
        %v634 = vmul.f32 %v606, %v626
        %v635 = vmul.f32 %v607, %v622
        %v636 = vmul.f32 %v608, %v626
        %v637 = vmul.f32 %v609, %v622
        %v638 = vmul.f32 %v610, %v626
        %v639 = vmul.f32 %v611, %v622
        %v640 = vmul.f32 %v612, %v626
        %v641 = vmul.f32 %v613, %v622
        %v642 = vmul.f32 %v614, %v626
        %v643 = vmul.f32 %v615, %v622
        %v644 = vmul.f32 %v616, %v626
        %v645 = vld [vmem:[%s3] sm:$0x3]
        %v647 = vlaneseq
        %v648 = vshrl.u32 %v647, 7
        %v649 = vsub.s32 0, %v648
        %v650 = vrot.slane %v645, %v649
        %v651 = vlaneseq
        %v652 = vshrl.u32 %v651, 7
        %v653 = vsub.s32 1, %v652
        %v654 = vrot.slane %v645, %v653
        %v657 = vadd.f32 %v629, %v650
        %v658 = vadd.f32 %v630, %v654
        %v659 = vadd.f32 %v631, %v650
        %v660 = vadd.f32 %v632, %v654
        %v661 = vadd.f32 %v633, %v650
        %v662 = vadd.f32 %v634, %v654
        %v663 = vadd.f32 %v635, %v650
        %v664 = vadd.f32 %v636, %v654
        %v665 = vadd.f32 %v637, %v650
        %v666 = vadd.f32 %v638, %v654
        %v667 = vadd.f32 %v639, %v650
        %v668 = vadd.f32 %v640, %v654
        %v669 = vadd.f32 %v641, %v650
        %v670 = vadd.f32 %v642, %v654
        %v671 = vadd.f32 %v643, %v650
        %v672 = vadd.f32 %v644, %v654
        %v673 = vld [vmem:[#allocation7] sm:$0xff]
        %v674 = vld [vmem:[#allocation7 + $0x8] sm:$0xff]
        %v675 = vld [vmem:[#allocation7 + $0x10] sm:$0xff]
        %v676 = vld [vmem:[#allocation7 + $0x18] sm:$0xff]
        %v677 = vld [vmem:[#allocation7 + $0x20] sm:$0xff]
        %v678 = vld [vmem:[#allocation7 + $0x28] sm:$0xff]
        %v679 = vld [vmem:[#allocation7 + $0x30] sm:$0xff]
        %v680 = vld [vmem:[#allocation7 + $0x38] sm:$0xff]
        %v681 = vld [vmem:[#allocation7 + $0x40] sm:$0xff]
        %v682 = vld [vmem:[#allocation7 + $0x48] sm:$0xff]
        %v683 = vld [vmem:[#allocation7 + $0x50] sm:$0xff]
        %v684 = vld [vmem:[#allocation7 + $0x58] sm:$0xff]
        %v685 = vld [vmem:[#allocation7 + $0x60] sm:$0xff]
        %v686 = vld [vmem:[#allocation7 + $0x68] sm:$0xff]
        %v687 = vld [vmem:[#allocation7 + $0x70] sm:$0xff]
        %v688 = vld [vmem:[#allocation7 + $0x78] sm:$0xff]
        %v689 = vld [vmem:[#allocation7 + $0x80] sm:$0xff]
        %v690 = vld [vmem:[#allocation7 + $0x88] sm:$0xff]
        %v691 = vld [vmem:[#allocation7 + $0x90] sm:$0xff]
        %v692 = vld [vmem:[#allocation7 + $0x98] sm:$0xff]
        %v693 = vld [vmem:[#allocation7 + $0xa0] sm:$0xff]
        %v694 = vld [vmem:[#allocation7 + $0xa8] sm:$0xff]
        %v695 = vld [vmem:[#allocation7 + $0xb0] sm:$0xff]
        %v696 = vld [vmem:[#allocation7 + $0xb8] sm:$0xff]
        %v697 = vld [vmem:[#allocation7 + $0xc0] sm:$0xff]
        %v698 = vld [vmem:[#allocation7 + $0xc8] sm:$0xff]
        %v699 = vld [vmem:[#allocation7 + $0xd0] sm:$0xff]
        %v700 = vld [vmem:[#allocation7 + $0xd8] sm:$0xff]
        %v701 = vld [vmem:[#allocation7 + $0xe0] sm:$0xff]
        %v702 = vld [vmem:[#allocation7 + $0xe8] sm:$0xff]
        %v703 = vld [vmem:[#allocation7 + $0xf0] sm:$0xff]
        %v704 = vld [vmem:[#allocation7 + $0xf8] sm:$0xff]
        %v705 = vld [vmem:[%s5] sm:$0x1]
        %v707 = vlaneseq
        %v708 = vshrl.u32 %v707, 7
        %v709 = vsub.s32 0, %v708
        %v710 = vrot.slane %v705, %v709
        %712 = vmatprep.subr.mxu0 0.0
        %713 = vmatpush1.msra.mxu0 %v688
        %714 = vmatprep.subr.mxu0 0.0
        %715 = vmatpush1.msra.mxu0 %v687
        %716 = vmatprep.subr.mxu0 0.0
        %717 = vmatpush1.msra.mxu0 %v686
        %718 = vmatprep.subr.mxu0 0.0
        %719 = vmatpush1.msra.mxu0 %v685
        %720 = vmatprep.subr.mxu0 0.0
        %721 = vmatpush1.msra.mxu0 %v684
        %722 = vmatprep.subr.mxu0 0.0
        %723 = vmatpush1.msra.mxu0 %v683
        %724 = vmatprep.subr.mxu0 0.0
        %725 = vmatpush1.msra.mxu0 %v682
        %726 = vmatprep.subr.mxu0 0.0
        %727 = vmatpush1.msra.mxu0 %v681
        %728 = vmatprep.subr.mxu0 0.0
        %729 = vmatpush1.msra.mxu0 %v680
        %730 = vmatprep.subr.mxu0 0.0
        %731 = vmatpush1.msra.mxu0 %v679
        %732 = vmatprep.subr.mxu0 0.0
        %733 = vmatpush1.msra.mxu0 %v678
        %734 = vmatprep.subr.mxu0 0.0
        %735 = vmatpush1.msra.mxu0 %v677
        %736 = vmatprep.subr.mxu0 0.0
        %737 = vmatpush1.msra.mxu0 %v676
        %738 = vmatprep.subr.mxu0 0.0
        %739 = vmatpush1.msra.mxu0 %v675
        %740 = vmatprep.subr.mxu0 0.0
        %741 = vmatpush1.msra.mxu0 %v674
        %742 = vmatprep.subr.mxu0 0.0
        %743 = vmatpush1.msra.mxu0 %v673
        %744 = vmatprep.subr.mxu0 0.0
        %745 = vmatpush2.msra.mxu0 %v704
        %746 = vmatprep.subr.mxu0 0.0
        %747 = vmatpush2.msra.mxu0 %v703
        %748 = vmatprep.subr.mxu0 0.0
        %749 = vmatpush2.msra.mxu0 %v702
        %750 = vmatprep.subr.mxu0 0.0
        %751 = vmatpush2.msra.mxu0 %v701
        %752 = vmatprep.subr.mxu0 0.0
        %753 = vmatpush2.msra.mxu0 %v700
        %754 = vmatprep.subr.mxu0 0.0
        %755 = vmatpush2.msra.mxu0 %v699
        %756 = vmatprep.subr.mxu0 0.0
        %757 = vmatpush2.msra.mxu0 %v698
        %758 = vmatprep.subr.mxu0 0.0
        %759 = vmatpush2.msra.mxu0 %v697
        %760 = vmatprep.subr.mxu0 0.0
        %761 = vmatpush2.msra.mxu0 %v696
        %762 = vmatprep.subr.mxu0 0.0
        %763 = vmatpush2.msra.mxu0 %v695
        %764 = vmatprep.subr.mxu0 0.0
        %765 = vmatpush2.msra.mxu0 %v694
        %766 = vmatprep.subr.mxu0 0.0
        %767 = vmatpush2.msra.mxu0 %v693
        %768 = vmatprep.subr.mxu0 0.0
        %769 = vmatpush2.msra.mxu0 %v692
        %770 = vmatprep.subr.mxu0 0.0
        %771 = vmatpush2.msra.mxu0 %v691
        %772 = vmatprep.subr.mxu0 0.0
        %773 = vmatpush2.msra.mxu0 %v690
        %774 = vmatprep.subr.mxu0 0.0
        %775 = vmatpush2.msra.mxu0 %v689
        %776 = vmatprep.mubr.f32.mxu0 %v658
        %777 = vmatmul.mubr.f32.gmra.mxu0 %v657
        %v778 = vpop.f32.mrf.mxu0
        %v779 = vadd.f32 %v710, %v778
        %v780 = vpop.f32.mrf.mxu0
        %781 = vmatprep.mubr.f32.mxu0 %v660
        %782 = vmatmul.mubr.f32.gmra.mxu0 %v659
        %v783 = vpop.f32.mrf.mxu0
        %v784 = vadd.f32 %v710, %v783
        %v785 = vpop.f32.mrf.mxu0
        %786 = vmatprep.mubr.f32.mxu0 %v662
        %787 = vmatmul.mubr.f32.gmra.mxu0 %v661
        %v788 = vpop.f32.mrf.mxu0
        %v789 = vadd.f32 %v710, %v788
        %v790 = vpop.f32.mrf.mxu0
        %791 = vmatprep.mubr.f32.mxu0 %v664
        %792 = vmatmul.mubr.f32.gmra.mxu0 %v663
        %v793 = vpop.f32.mrf.mxu0
        %v794 = vadd.f32 %v710, %v793
        %v795 = vpop.f32.mrf.mxu0
        %796 = vmatprep.mubr.f32.mxu0 %v666
        %797 = vmatmul.mubr.f32.gmra.mxu0 %v665
        %v798 = vpop.f32.mrf.mxu0
        %v799 = vadd.f32 %v710, %v798
        %v800 = vpop.f32.mrf.mxu0
        %801 = vmatprep.mubr.f32.mxu0 %v668
        %802 = vmatmul.mubr.f32.gmra.mxu0 %v667
        %v803 = vpop.f32.mrf.mxu0
        %v804 = vadd.f32 %v710, %v803
        %v805 = vpop.f32.mrf.mxu0
        %806 = vmatprep.mubr.f32.mxu0 %v670
        %807 = vmatmul.mubr.f32.gmra.mxu0 %v669
        %v808 = vpop.f32.mrf.mxu0
        %v809 = vadd.f32 %v710, %v808
        %v810 = vpop.f32.mrf.mxu0
        %811 = vmatprep.mubr.f32.mxu0 %v672
        %812 = vmatmul.mubr.f32.gmra.mxu0 %v671
        %v813 = vpop.f32.mrf.mxu0
        %v814 = vadd.f32 %v710, %v813
        %v815 = vpop.f32.mrf.mxu0
        %816 = vdwg.mxu0
        %v817 = vmax.f32 %v779, 0.0
        %v818 = vmax.f32 %v784, 0.0
        %v819 = vmax.f32 %v789, 0.0
        %v820 = vmax.f32 %v794, 0.0
        %v821 = vmax.f32 %v799, 0.0
        %v822 = vmax.f32 %v804, 0.0
        %v823 = vmax.f32 %v809, 0.0
        %v824 = vmax.f32 %v814, 0.0
        %v825 = vld [vmem:[#allocation8] sm:$0xff]
        %v826 = vld [vmem:[#allocation8 + $0x8] sm:$0xff]
        %v827 = vld [vmem:[#allocation8 + $0x10] sm:$0xff]
        %v828 = vld [vmem:[#allocation8 + $0x18] sm:$0xff]
        %v829 = vld [vmem:[#allocation8 + $0x20] sm:$0xff]
        %v830 = vld [vmem:[#allocation8 + $0x28] sm:$0xff]
        %v831 = vld [vmem:[#allocation8 + $0x30] sm:$0xff]
        %v832 = vld [vmem:[#allocation8 + $0x38] sm:$0xff]
        %v833 = vld [vmem:[#allocation8 + $0x40] sm:$0xff]
        %v834 = vld [vmem:[#allocation8 + $0x48] sm:$0xff]
        %v835 = vld [vmem:[#allocation8 + $0x50] sm:$0xff]
        %v836 = vld [vmem:[#allocation8 + $0x58] sm:$0xff]
        %v837 = vld [vmem:[#allocation8 + $0x60] sm:$0xff]
        %v838 = vld [vmem:[#allocation8 + $0x68] sm:$0xff]
        %v839 = vld [vmem:[#allocation8 + $0x70] sm:$0xff]
        %v840 = vld [vmem:[#allocation8 + $0x78] sm:$0xff]
        %v841 = vld [vmem:[#allocation8 + $0x80] sm:$0xff]
        %v842 = vld [vmem:[#allocation8 + $0x88] sm:$0xff]
        %v843 = vld [vmem:[#allocation8 + $0x90] sm:$0xff]
        %v844 = vld [vmem:[#allocation8 + $0x98] sm:$0xff]
        %v845 = vld [vmem:[#allocation8 + $0xa0] sm:$0xff]
        %v846 = vld [vmem:[#allocation8 + $0xa8] sm:$0xff]
        %v847 = vld [vmem:[#allocation8 + $0xb0] sm:$0xff]
        %v848 = vld [vmem:[#allocation8 + $0xb8] sm:$0xff]
        %v849 = vld [vmem:[#allocation8 + $0xc0] sm:$0xff]
        %v850 = vld [vmem:[#allocation8 + $0xc8] sm:$0xff]
        %v851 = vld [vmem:[#allocation8 + $0xd0] sm:$0xff]
        %v852 = vld [vmem:[#allocation8 + $0xd8] sm:$0xff]
        %v853 = vld [vmem:[#allocation8 + $0xe0] sm:$0xff]
        %v854 = vld [vmem:[#allocation8 + $0xe8] sm:$0xff]
        %v855 = vld [vmem:[#allocation8 + $0xf0] sm:$0xff]
        %v856 = vld [vmem:[#allocation8 + $0xf8] sm:$0xff]
        %v857 = vld [vmem:[%s7] sm:$0x3]
        %v859 = vlaneseq
        %v860 = vshrl.u32 %v859, 7
        %v861 = vsub.s32 0, %v860
        %v862 = vrot.slane %v857, %v861
        %v863 = vlaneseq
        %v864 = vshrl.u32 %v863, 7
        %v865 = vsub.s32 1, %v864
        %v866 = vrot.slane %v857, %v865
        %869 = vmatprep.subr.mxu0 %v856
        %870 = vmatpush1.msra.mxu0 %v855
        %871 = vmatprep.subr.mxu0 %v854
        %872 = vmatpush1.msra.mxu0 %v853
        %873 = vmatprep.subr.mxu0 %v852
        %874 = vmatpush1.msra.mxu0 %v851
        %875 = vmatprep.subr.mxu0 %v850
        %876 = vmatpush1.msra.mxu0 %v849
        %877 = vmatprep.subr.mxu0 %v848
        %878 = vmatpush1.msra.mxu0 %v847
        %879 = vmatprep.subr.mxu0 %v846
        %880 = vmatpush1.msra.mxu0 %v845
        %881 = vmatprep.subr.mxu0 %v844
        %882 = vmatpush1.msra.mxu0 %v843
        %883 = vmatprep.subr.mxu0 %v842
        %884 = vmatpush1.msra.mxu0 %v841
        %885 = vmatprep.subr.mxu0 %v840
        %886 = vmatpush1.msra.mxu0 %v839
        %887 = vmatprep.subr.mxu0 %v838
        %888 = vmatpush1.msra.mxu0 %v837
        %889 = vmatprep.subr.mxu0 %v836
        %890 = vmatpush1.msra.mxu0 %v835
        %891 = vmatprep.subr.mxu0 %v834
        %892 = vmatpush1.msra.mxu0 %v833
        %893 = vmatprep.subr.mxu0 %v832
        %894 = vmatpush1.msra.mxu0 %v831
        %895 = vmatprep.subr.mxu0 %v830
        %896 = vmatpush1.msra.mxu0 %v829
        %897 = vmatprep.subr.mxu0 %v828
        %898 = vmatpush1.msra.mxu0 %v827
        %899 = vmatprep.subr.mxu0 %v826
        %900 = vmatpush1.msra.mxu0 %v825
        %901 = vmatprep.subr.mxu0 0.0
        %902 = vmatpush2.msra.mxu0 0.0
        %903 = vmatprep.subr.mxu0 0.0
        %904 = vmatpush2.msra.mxu0 0.0
        %905 = vmatprep.subr.mxu0 0.0
        %906 = vmatpush2.msra.mxu0 0.0
        %907 = vmatprep.subr.mxu0 0.0
        %908 = vmatpush2.msra.mxu0 0.0
        %909 = vmatprep.subr.mxu0 0.0
        %910 = vmatpush2.msra.mxu0 0.0
        %911 = vmatprep.subr.mxu0 0.0
        %912 = vmatpush2.msra.mxu0 0.0
        %913 = vmatprep.subr.mxu0 0.0
        %914 = vmatpush2.msra.mxu0 0.0
        %915 = vmatprep.subr.mxu0 0.0
        %916 = vmatpush2.msra.mxu0 0.0
        %917 = vmatprep.subr.mxu0 0.0
        %918 = vmatpush2.msra.mxu0 0.0
        %919 = vmatprep.subr.mxu0 0.0
        %920 = vmatpush2.msra.mxu0 0.0
        %921 = vmatprep.subr.mxu0 0.0
        %922 = vmatpush2.msra.mxu0 0.0
        %923 = vmatprep.subr.mxu0 0.0
        %924 = vmatpush2.msra.mxu0 0.0
        %925 = vmatprep.subr.mxu0 0.0
        %926 = vmatpush2.msra.mxu0 0.0
        %927 = vmatprep.subr.mxu0 0.0
        %928 = vmatpush2.msra.mxu0 0.0
        %929 = vmatprep.subr.mxu0 0.0
        %930 = vmatpush2.msra.mxu0 0.0
        %931 = vmatprep.subr.mxu0 0.0
        %932 = vmatpush2.msra.mxu0 0.0
        %933 = vmatprep.mubr.f32.mxu0 0.0
        %934 = vmatmul.mubr.f32.gmra.mxu0 %v817
        %v935 = vpop.f32.mrf.mxu0
        %v936 = vadd.f32 %v862, %v935
        %v937 = vpop.f32.mrf.mxu0
        %v938 = vadd.f32 %v866, %v937
        %939 = vmatprep.mubr.f32.mxu0 0.0
        %940 = vmatmul.mubr.f32.gmra.mxu0 %v818
        %v941 = vpop.f32.mrf.mxu0
        %v942 = vadd.f32 %v862, %v941
        %v943 = vpop.f32.mrf.mxu0
        %v944 = vadd.f32 %v866, %v943
        %945 = vmatprep.mubr.f32.mxu0 0.0
        %946 = vmatmul.mubr.f32.gmra.mxu0 %v819
        %v947 = vpop.f32.mrf.mxu0
        %v948 = vadd.f32 %v862, %v947
        %v949 = vpop.f32.mrf.mxu0
        %v950 = vadd.f32 %v866, %v949
        %951 = vmatprep.mubr.f32.mxu0 0.0
        %952 = vmatmul.mubr.f32.gmra.mxu0 %v820
        %v953 = vpop.f32.mrf.mxu0
        %v954 = vadd.f32 %v862, %v953
        %v955 = vpop.f32.mrf.mxu0
        %v956 = vadd.f32 %v866, %v955
        %957 = vmatprep.mubr.f32.mxu0 0.0
        %958 = vmatmul.mubr.f32.gmra.mxu0 %v821
        %v959 = vpop.f32.mrf.mxu0
        %v960 = vadd.f32 %v862, %v959
        %v961 = vpop.f32.mrf.mxu0
        %v962 = vadd.f32 %v866, %v961
        %963 = vmatprep.mubr.f32.mxu0 0.0
        %964 = vmatmul.mubr.f32.gmra.mxu0 %v822
        %v965 = vpop.f32.mrf.mxu0
        %v966 = vadd.f32 %v862, %v965
        %v967 = vpop.f32.mrf.mxu0
        %v968 = vadd.f32 %v866, %v967
        %969 = vmatprep.mubr.f32.mxu0 0.0
        %970 = vmatmul.mubr.f32.gmra.mxu0 %v823
        %v971 = vpop.f32.mrf.mxu0
        %v972 = vadd.f32 %v862, %v971
        %v973 = vpop.f32.mrf.mxu0
        %v974 = vadd.f32 %v866, %v973
        %975 = vmatprep.mubr.f32.mxu0 0.0
        %976 = vmatmul.mubr.f32.gmra.mxu0 %v824
        %v977 = vpop.f32.mrf.mxu0
        %v978 = vadd.f32 %v862, %v977
        %v979 = vpop.f32.mrf.mxu0
        %v980 = vadd.f32 %v866, %v979
        %981 = vdwg.mxu0
        %v982 = vld [vmem:[%s407] sm:$0xff]
        %v983 = vld [vmem:[%s407 + $0x8] sm:$0xff]
        %v984 = vld [vmem:[%s407 + $0x10] sm:$0xff]
        %v985 = vld [vmem:[%s407 + $0x18] sm:$0xff]
        %v986 = vld [vmem:[%s407 + $0x20] sm:$0xff]
        %v987 = vld [vmem:[%s407 + $0x28] sm:$0xff]
        %v988 = vld [vmem:[%s407 + $0x30] sm:$0xff]
        %v989 = vld [vmem:[%s407 + $0x38] sm:$0xff]
        %v990 = vld [vmem:[%s407 + $0x40] sm:$0xff]
        %v991 = vld [vmem:[%s407 + $0x48] sm:$0xff]
        %v992 = vld [vmem:[%s407 + $0x50] sm:$0xff]
        %v993 = vld [vmem:[%s407 + $0x58] sm:$0xff]
        %v994 = vld [vmem:[%s407 + $0x60] sm:$0xff]
        %v995 = vld [vmem:[%s407 + $0x68] sm:$0xff]
        %v996 = vld [vmem:[%s407 + $0x70] sm:$0xff]
        %v997 = vld [vmem:[%s407 + $0x78] sm:$0xff]
        %v998 = vadd.f32 %v936, %v982
        %v999 = vadd.f32 %v938, %v983
        %v1000 = vadd.f32 %v942, %v984
        %v1001 = vadd.f32 %v944, %v985
        %v1002 = vadd.f32 %v948, %v986
        %v1003 = vadd.f32 %v950, %v987
        %v1004 = vadd.f32 %v954, %v988
        %v1005 = vadd.f32 %v956, %v989
        %v1006 = vadd.f32 %v960, %v990
        %v1007 = vadd.f32 %v962, %v991
        %v1008 = vadd.f32 %v966, %v992
        %v1009 = vadd.f32 %v968, %v993
        %v1010 = vadd.f32 %v972, %v994
        %v1011 = vadd.f32 %v974, %v995
        %v1012 = vadd.f32 %v978, %v996
        %v1013 = vadd.f32 %v980, %v997
        %1014 = vst [vmem:[%s452] sm:$0xff] %v998
        %1015 = vst [vmem:[%s452 + $0x8] sm:$0xff] %v999
        %1016 = vst [vmem:[%s452 + $0x10] sm:$0xff] %v1000
        %1017 = vst [vmem:[%s452 + $0x18] sm:$0xff] %v1001
        %1018 = vst [vmem:[%s452 + $0x20] sm:$0xff] %v1002
        %1019 = vst [vmem:[%s452 + $0x28] sm:$0xff] %v1003
        %1020 = vst [vmem:[%s452 + $0x30] sm:$0xff] %v1004
        %1021 = vst [vmem:[%s452 + $0x38] sm:$0xff] %v1005
        %1022 = vst [vmem:[%s452 + $0x40] sm:$0xff] %v1006
        %1023 = vst [vmem:[%s452 + $0x48] sm:$0xff] %v1007
        %1024 = vst [vmem:[%s452 + $0x50] sm:$0xff] %v1008
        %1025 = vst [vmem:[%s452 + $0x58] sm:$0xff] %v1009
        %1026 = vst [vmem:[%s452 + $0x60] sm:$0xff] %v1010
        %1027 = vst [vmem:[%s452 + $0x68] sm:$0xff] %v1011
        %1028 = vst [vmem:[%s452 + $0x70] sm:$0xff] %v1012
        %1029 = vst [vmem:[%s452 + $0x78] sm:$0xff] %v1013
        %1030 = vst [vmem:[%s459] sm:$0xff] %v817
        %1031 = vst [vmem:[%s459 + $0x8] sm:$0xff] %v818
        %1032 = vst [vmem:[%s459 + $0x10] sm:$0xff] %v819
        %1033 = vst [vmem:[%s459 + $0x18] sm:$0xff] %v820
        %1034 = vst [vmem:[%s459 + $0x20] sm:$0xff] %v821
        %1035 = vst [vmem:[%s459 + $0x28] sm:$0xff] %v822
        %1036 = vst [vmem:[%s459 + $0x30] sm:$0xff] %v823
        %1037 = vst [vmem:[%s459 + $0x38] sm:$0xff] %v824
        %1038 = vst [vmem:[%s466] sm:$0xff] %v936
        %1039 = vst [vmem:[%s466 + $0x8] sm:$0xff] %v938
        %1040 = vst [vmem:[%s466 + $0x10] sm:$0xff] %v942
        %1041 = vst [vmem:[%s466 + $0x18] sm:$0xff] %v944
        %1042 = vst [vmem:[%s466 + $0x20] sm:$0xff] %v948
        %1043 = vst [vmem:[%s466 + $0x28] sm:$0xff] %v950
        %1044 = vst [vmem:[%s466 + $0x30] sm:$0xff] %v954
        %1045 = vst [vmem:[%s466 + $0x38] sm:$0xff] %v956
        %1046 = vst [vmem:[%s466 + $0x40] sm:$0xff] %v960
        %1047 = vst [vmem:[%s466 + $0x48] sm:$0xff] %v962
        %1048 = vst [vmem:[%s466 + $0x50] sm:$0xff] %v966
        %1049 = vst [vmem:[%s466 + $0x58] sm:$0xff] %v968
        %1050 = vst [vmem:[%s466 + $0x60] sm:$0xff] %v972
        %1051 = vst [vmem:[%s466 + $0x68] sm:$0xff] %v974
        %1052 = vst [vmem:[%s466 + $0x70] sm:$0xff] %v978
        %1053 = vst [vmem:[%s466 + $0x78] sm:$0xff] %v980
        %s1054 = sand.u32 %s221, 1
        %s1055 = scalar_lea.sflag [#allocation4], %s1054
        %s1056 = sand.u32 %s221, 1
        %s1057 = smul.addr %s1056, 128
        %s1058 = scalar_lea.vmem [#allocation10], %s1057
        %s1059 = sand.u32 %s35, 1
        %s1060 = scalar_lea.sflag [#allocation12], %s1059
        %s1061 = sand.u32 %s247, 1
        %s1062 = smul.addr %s1061, 64
        %s1063 = scalar_lea.vmem [#allocation11], %s1062
        %s1064 = sand.u32 %s35, 1
        %s1065 = scalar_lea.sflag [#allocation12], %s1064
        %s1066 = sand.u32 %s273, 1
        %s1067 = smul.addr %s1066, 128
        %s1068 = scalar_lea.vmem [#allocation13], %s1067
        // Predicated region
        $region69: #{tpu_custom_call.1} parent=51 // pred_check
          %p1069 = pneg %p231
        $region70: #{tpu_custom_call.1} parent=51 // pred_check_branch
          %1071 = sbr.rel (%p1069) target = $region72
        $region71: #{tpu_custom_call.1} parent=51 // pred_region
          %s1072 = smul.u32 8, %s35
          %s1074 = ssub.s32 2048, 2048
          %1075 = vsyncadd %s1055, %s1074
          %s1076 = smul.addr %s1072, 2
          %s1077 = smul.addr %s1076, 128
          %s1078 = scalar_lea.hbm %s8, %s1077
          %s1079 = sshll.u32 %s1058, 4
          %s1080 = int_to_ptr.vmem [resolvable:$true] %s1079
          %1085 = dma.vmem_to_hbm [thread:$0]  %s1080, 2048, %s1078, %s1055, 256, 256, 16
        $region72: #{tpu_custom_call.1} parent=51 // pred_fallthru
          _
        // Predicated region
        $region73: #{tpu_custom_call.1} parent=51 // pred_check
          %p1086 = pneg %p257
        $region74: #{tpu_custom_call.1} parent=51 // pred_check_branch
          %1088 = sbr.rel (%p1086) target = $region76
        $region75: #{tpu_custom_call.1} parent=51 // pred_region
          %s1089 = smul.u32 8, %s35
          %s1091 = ssub.s32 1024, 1024
          %1092 = vsyncadd %s1060, %s1091
          %s1093 = smul.addr %s1089, 128
          %s1094 = scalar_lea.hbm %s9, %s1093
          %s1095 = sshll.u32 %s1063, 4
          %s1096 = int_to_ptr.vmem [resolvable:$true] %s1095
          %1101 = dma.vmem_to_hbm [thread:$0]  %s1096, 1024, %s1094, %s1060, 128, 128, 8
        $region76: #{tpu_custom_call.1} parent=51 // pred_fallthru
          _
        // Predicated region
        $region77: #{tpu_custom_call.1} parent=51 // pred_check
          %p1102 = pneg %p283
        $region78: #{tpu_custom_call.1} parent=51 // pred_check_branch
          %1104 = sbr.rel (%p1102) target = $region80
        $region79: #{tpu_custom_call.1} parent=51 // pred_region
          %s1105 = smul.u32 8, %s35
          %s1107 = ssub.s32 2048, 2048
          %1108 = vsyncadd %s1065, %s1107
          %s1109 = smul.addr %s1105, 2
          %s1110 = smul.addr %s1109, 128
          %s1111 = scalar_lea.hbm %s10, %s1110
          %s1112 = sshll.u32 %s1068, 4
          %s1113 = int_to_ptr.vmem [resolvable:$true] %s1112
          %1118 = dma.vmem_to_hbm [thread:$0]  %s1113, 2048, %s1111, %s1065, 256, 256, 16
        $region80: #{tpu_custom_call.1} parent=51 // pred_fallthru
          _
      $region52: #{tpu_custom_call.1} parent=5 // pred_fallthru
        _
      %p1119 = scmp.le.s32.totalorder 2, %s30
      // Predicated region
      $region81: #{tpu_custom_call.1} parent=5 // pred_check
        %p1120 = pneg %p1119
      $region82: #{tpu_custom_call.1} parent=5 // pred_check_branch
        %1122 = sbr.rel (%p1120) target = $region84
      $region83: #{tpu_custom_call.1} parent=5 // pred_region
        %s1123 = ssub.s32 %s30, 2
        // Predicated region
        $region85: #{tpu_custom_call.1} parent=83 // pred_check
          %p1124 = pneg %p237
        $region86: #{tpu_custom_call.1} parent=83 // pred_check_branch
          %1126 = sbr.rel (%p1124) target = $region88
        $region87: #{tpu_custom_call.1} parent=83 // pred_region
          %s1127 = sand.u32 %s222, 1
          %s1128 = scalar_lea.sflag [#allocation4], %s1127
          %s1129 = sand.u32 %s222, 1
          %s1130 = smul.addr %s1129, 128
          %s1131 = scalar_lea.vmem [#allocation10], %s1130
          %1132 = dma.done %s1128, 2048
        $region88: #{tpu_custom_call.1} parent=83 // pred_fallthru
          _
        // Predicated region
        $region89: #{tpu_custom_call.1} parent=83 // pred_check
          %p1133 = pneg %p263
        $region90: #{tpu_custom_call.1} parent=83 // pred_check_branch
          %1135 = sbr.rel (%p1133) target = $region92
        $region91: #{tpu_custom_call.1} parent=83 // pred_region
          %s1136 = sand.u32 %s36, 1
          %s1137 = scalar_lea.sflag [#allocation12], %s1136
          %s1138 = sand.u32 %s248, 1
          %s1139 = smul.addr %s1138, 64
          %s1140 = scalar_lea.vmem [#allocation11], %s1139
          %1141 = dma.done %s1137, 1024
        $region92: #{tpu_custom_call.1} parent=83 // pred_fallthru
          _
        // Predicated region
        $region93: #{tpu_custom_call.1} parent=83 // pred_check
          %p1142 = pneg %p289
        $region94: #{tpu_custom_call.1} parent=83 // pred_check_branch
          %1144 = sbr.rel (%p1142) target = $region96
        $region95: #{tpu_custom_call.1} parent=83 // pred_region
          %s1145 = sand.u32 %s36, 1
          %s1146 = scalar_lea.sflag [#allocation12], %s1145
          %s1147 = sand.u32 %s274, 1
          %s1148 = smul.addr %s1147, 128
          %s1149 = scalar_lea.vmem [#allocation13], %s1148
          %1150 = dma.done %s1146, 2048
        $region96: #{tpu_custom_call.1} parent=83 // pred_fallthru
          _
      $region84: #{tpu_custom_call.1} parent=5 // pred_fallthru
        _
    $region6: #{tpu_custom_call.1} parent=1 // loop_footer
      %s34 = sadd.s32 1, %s30
    $region7: #{tpu_custom_call.1} parent=1 // loop_footer_branch
      %29 = sbr.rel target = $region3
    $region8: #{tpu_custom_call.1} parent=1 // loop_exit
      _
    %1151 = vsyncpa [#allocation3], 1
    %s1152 = scalar_lea.sflag [#allocation3], 1
    %1153 = vsyncpa %s1152, 1
    %1154 = vsyncpa [#allocation6], 1
    %s1155 = scalar_lea.sflag [#allocation6], 1
    %1156 = vsyncpa %s1155, 1
    %1157 = vsyncpa [#allocation9], 1
    %1158 = vsyncpa [#allocation4], 1
    %s1159 = scalar_lea.sflag [#allocation4], 1
    %1160 = vsyncpa %s1159, 1
    %1161 = vsyncpa [#allocation12], 1
    %s1162 = scalar_lea.sflag [#allocation12], 1
    %1163 = vsyncpa %s1162, 1

</llo_original>
